<compile_context>
chip_gen: v5e
topology: v5e:2x2
jax: 0.10.0
libtpu: 0.0.40
codegen_flags: <defaults>
</compile_context>

<pallas_src>
import functools

import jax
import jax.numpy as jnp
from jax.experimental import pallas as pl
from jax.experimental.pallas import tpu as pltpu


def tca_kernel(x_ref, w_ref, st_ref, out_ref, *, l_valid):
    # x_ref  : (Bt, Lp, D_w)  batch tile (Lp % 8 == 0)
    # w_ref  : (D_w, D_l)     label projection weight (transposed vs torch)
    # st_ref : (D_l, C)       S_h^T (pre-transposed in the wrapper)
    # out_ref: (Bt, D_w)      per-batch-tile output slab
    Bt, Lp, Dw = x_ref.shape
    Dl, C = st_ref.shape

    x = x_ref[...]                                       # (Bt, Lp, Dw)
    w = w_ref[...]                                       # (Dw, Dl)
    st = st_ref[...]                                     # (Dl, C)

    # O = tanh(x @ W): one fat (Bt*Lp, Dw) @ (Dw, Dl) MXU matmul.  Lp is a
    # multiple of 8 so the reshape is a pure layout no-op.
    o = jnp.tanh(
        jnp.dot(x.reshape(Bt * Lp, Dw), w, preferred_element_type=jnp.float32)
    )                                                    # (Bt*Lp, Dl)

    # Scores: one fat (Bt*Lp, Dl) @ (Dl, C) MXU matmul against S_h^T.
    # Kept as (Bt, Lp, C): softmax reduces over the sublane axis (Lp), so we
    # never build O^T or per-batch tiny matmuls.
    a = jnp.dot(o, st, preferred_element_type=jnp.float32).reshape(Bt, Lp, C)

    if l_valid != Lp:
        # Padded sequence rows must not contribute to the softmax.
        l_idx = jax.lax.broadcasted_iota(jnp.int32, (Bt, Lp, C), 1)
        a = jnp.where(l_idx < l_valid, a, -jnp.inf)

    # Numerically stable softmax over the sequence axis (axis=1).
    a = a - jnp.max(a, axis=1, keepdims=True)
    e = jnp.exp(a)
    p = e * pl.reciprocal(jnp.sum(e, axis=1, keepdims=True), approx=True)

    # Fold the class mean into the attention weights, then contract over L on
    # the VPU: mean_c(P @ x) == (mean_c P) @ x.
    p_bar = jnp.mean(p, axis=2, keepdims=True)           # (Bt, Lp, 1)
    y = jnp.sum(p_bar * x, axis=1)                       # (Bt, Dw)

    out_ref[...] = y.astype(out_ref.dtype)


def _vmem_capacity_bytes():
    """Physical per-core VMEM; conservative (v7x) fallback off-TPU."""
    try:
        cap = getattr(pltpu.get_tpu_info(), "vmem_capacity_bytes", None)
        if cap:
            return int(cap)
    except Exception:
        pass
    return 64 << 20


def _pick_block_b(B, Lp, Dw, Dl, C, vmem_limit_bytes):
    """Batch-tile size (multiple of 8).

    Sized so double-buffered x tiles + output slabs + params + in-body f32
    temporaries fit inside ~60% of the scoped VMEM limit; capped at the
    (rounded-up) batch; and halved when the batch is large enough that >= 2
    grid steps buy DMA/compute overlap (and megacore sharding)."""
    param_bytes = 2 * 4 * (Dw * Dl + Dl * C)          # double-buffered params
    per_b = 4 * (2 * Lp * Dw                          # double-buffered x tile
                 + 2 * Dw                             # double-buffered out slab
                 + Lp * Dl                            # o = tanh(x @ W)
                 + 3 * Lp * C                         # scores / exp / probs
                 + Lp + 3 * Dw)                       # p_bar, y, misc
    budget = max(int(vmem_limit_bytes * 0.6) - param_bytes, 8 * per_b)
    bt = budget // per_b
    bt = min(bt, max(8, -(-B // 8) * 8))              # never exceed padded batch
    if B >= 16:                                       # keep >= 2 grid steps
        bt = min(bt, max(8, (-(-B // 2) // 8) * 8))
    return max(8, (bt // 8) * 8)


def tca_forward(word_x, w_label, s_h, *, block_b=None):
    """word_x: (B, L, D_w) f32; w_label: (D_w, D_l) f32; s_h: (C, D_l) f32."""
    B, L, Dw = word_x.shape
    Dl = w_label.shape[1]
    C = s_h.shape[0]

    # Pad L to a multiple of 8 so in-kernel reshapes are layout no-ops; padded
    # rows are masked to -inf before the softmax inside the kernel.
    Lp = max(8, ((L + 7) // 8) * 8)
    xp = word_x if Lp == L else jnp.pad(word_x, ((0, 0), (0, Lp - L), (0, 0)))

    # Generation-aware VMEM budget (v5e/v6e: 128 MiB phys -> 96 MiB scoped,
    # v7x: 64 MiB phys -> 48 MiB scoped).
    vmem_cap = _vmem_capacity_bytes()
    vmem_limit = min(int(vmem_cap * 0.75), 100 << 20)

    Bt = block_b if block_b is not None else _pick_block_b(B, Lp, Dw, Dl, C,
                                                           vmem_limit)
    Bp = ((B + Bt - 1) // Bt) * Bt                    # pad batch to full tiles
    if Bp != B:
        xp = jnp.pad(xp, ((0, Bp - B), (0, 0), (0, 0)))

    s_t = jnp.transpose(s_h)                          # (D_l, C): S_h^T

    out = pl.pallas_call(
        functools.partial(tca_kernel, l_valid=L),
        out_shape=jax.ShapeDtypeStruct((Bp, Dw), jnp.float32),
        grid_spec=pltpu.PrefetchScalarGridSpec(
            num_scalar_prefetch=0,
            grid=(Bp // Bt,),
            in_specs=[
                # Bt batch elements per grid step.
                pl.BlockSpec((Bt, Lp, Dw), lambda b: (b, 0, 0)),
                # Parameters: full arrays, same block every step (tiny; could
                # be single-buffered via pipeline_mode if they ever grow).
                pl.BlockSpec((Dw, Dl), lambda b: (0, 0)),
                pl.BlockSpec((Dl, C), lambda b: (0, 0)),
            ],
            # Sublane-full (Bt, D_w) output slab.
            out_specs=pl.BlockSpec((Bt, Dw), lambda b: (b, 0)),
        ),
        compiler_params=pltpu.CompilerParams(
            dimension_semantics=("parallel",),
            vmem_limit_bytes=vmem_limit),
    )(xp, w_label, s_t)
    return out[:B]


def tca_reference(word_x, w_label, s_h):
    o = jnp.tanh(jnp.einsum("bld,de->ble", word_x, w_label))        # (B,L,Dl)
    a = jnp.einsum("ce,ble->bcl", s_h, o)                           # (B,C,L)
    p = jax.nn.softmax(a, axis=-1)
    y = jnp.einsum("bcl,bld->bcd", p, word_x)                       # (B,C,Dw)
    return jnp.mean(y, axis=1)                                      # (B,Dw)


if __name__ == "__main__":
    # Small shapes consistent with the module's forward.
    B, L = 16, 8                # batch, sequence length
    word_feature_dim = 32       # D_w
    label_feature_dim = 16      # D_l
    num_classes = 4             # C

    key = jax.random.PRNGKey(0)
    k_x, k_w, k_s, k_x2 = jax.random.split(key, 4)

    word_x = jax.random.normal(k_x, (B, L, word_feature_dim), dtype=jnp.float32)

    # Deterministic synthetic parameters mirroring the module's __init__.
    # linear_label.weight in PyTorch is (D_l, D_w); we store its transpose.
    w_label = jax.random.normal(
        k_w, (word_feature_dim, label_feature_dim), dtype=jnp.float32) * 0.1
    xavier_std = (2.0 / (num_classes + label_feature_dim)) ** 0.5
    s_h = jax.random.normal(
        k_s, (num_classes, label_feature_dim), dtype=jnp.float32) * xavier_std

    out = jax.block_until_ready(tca_forward(word_x, w_label, s_h))
    ref = jax.block_until_ready(tca_reference(word_x, w_label, s_h))
    assert out.shape == (B, word_feature_dim)
    assert jnp.allclose(out, ref, atol=2e-2, rtol=2e-2), "mismatch vs reference"

    # Tail / padding path: batch not a multiple of the batch tile.
    word_x2 = jax.random.normal(k_x2, (3, L, word_feature_dim), dtype=jnp.float32)
    out2 = jax.block_until_ready(tca_forward(word_x2, w_label, s_h))
    ref2 = jax.block_until_ready(tca_reference(word_x2, w_label, s_h))
    assert out2.shape == (3, word_feature_dim)
    assert jnp.allclose(out2, ref2, atol=2e-2, rtol=2e-2), "mismatch (tail case)"

    print("KERNEL_OK")
</pallas_src>

<mosaic_0001>
module attributes {stable_mosaic.version = 11 : i64} {
  func.func @tca_kernel(%arg0: i32, %arg1: memref<8x8x32xf32, #tpu.memory_space<vmem>>, %arg2: memref<32x16xf32, #tpu.memory_space<vmem>>, %arg3: memref<16x4xf32, #tpu.memory_space<vmem>>, %arg4: memref<8x32xf32, #tpu.memory_space<vmem>>) attributes {dimension_semantics = [#tpu.dimension_semantics<parallel>], iteration_bounds = array<i64: 2>, scalar_prefetch = 0 : i64, scratch_operands = 0 : i64, tpu.core_type = #tpu.core_type<tc>, window_params = [{transform_indices = @transform_0, window_bounds = array<i64: 8, 8, 32>}, {pipeline_mode = #tpu.pipeline_mode<synchronous>, transform_indices = @transform_1, window_bounds = array<i64: 32, 16>}, {pipeline_mode = #tpu.pipeline_mode<synchronous>, transform_indices = @transform_2, window_bounds = array<i64: 16, 4>}, {transform_indices = @transform_3, window_bounds = array<i64: 8, 32>}]} {
    %c0 = arith.constant 0 : index
    %c0_0 = arith.constant 0 : index
    %c0_1 = arith.constant 0 : index
    %0 = vector.load %arg1[%c0, %c0_0, %c0_1] : memref<8x8x32xf32, #tpu.memory_space<vmem>>, vector<8x8x32xf32>
    %c0_2 = arith.constant 0 : index
    %c0_3 = arith.constant 0 : index
    %1 = vector.load %arg2[%c0_2, %c0_3] : memref<32x16xf32, #tpu.memory_space<vmem>>, vector<32x16xf32>
    %c0_4 = arith.constant 0 : index
    %c0_5 = arith.constant 0 : index
    %2 = vector.load %arg3[%c0_4, %c0_5] : memref<16x4xf32, #tpu.memory_space<vmem>>, vector<16x4xf32>
    %3 = vector.shape_cast %0 : vector<8x8x32xf32> to vector<64x32xf32>
    %cst = arith.constant dense<0.000000e+00> : vector<64x16xf32>
    %4 = tpu.matmul %3, %1, %cst {dimension_numbers = #tpu.dot_dimension_numbers<[1], [0], [0], [1], [0, 0, 1, 1], [], []>} : vector<64x32xf32>, vector<32x16xf32>, vector<64x16xf32> -> vector<64x16xf32>
    %5 = math.tanh %4 : vector<64x16xf32>
    %cst_6 = arith.constant dense<0.000000e+00> : vector<64x4xf32>
    %6 = tpu.matmul %5, %2, %cst_6 {dimension_numbers = #tpu.dot_dimension_numbers<[1], [0], [0], [1], [0, 0, 1, 1], [], []>} : vector<64x16xf32>, vector<16x4xf32>, vector<64x4xf32> -> vector<64x4xf32>
    %7 = vector.shape_cast %6 : vector<64x4xf32> to vector<8x8x4xf32>
    %cst_7 = arith.constant dense<0xFF800000> : vector<8x4xf32>
    %8 = vector.multi_reduction <maximumf>, %7, %cst_7 [1] : vector<8x8x4xf32> to vector<8x4xf32>
    %9 = vector.shape_cast %8 : vector<8x4xf32> to vector<8x1x4xf32>
    %10 = vector.broadcast %9 : vector<8x1x4xf32> to vector<8x8x4xf32>
    %11 = arith.subf %7, %10 : vector<8x8x4xf32>
    %12 = math.exp %11 : vector<8x8x4xf32>
    %cst_8 = arith.constant dense<0.000000e+00> : vector<8x4xf32>
    %13 = vector.multi_reduction <add>, %12, %cst_8 [1] : vector<8x8x4xf32> to vector<8x4xf32>
    %14 = vector.shape_cast %13 : vector<8x4xf32> to vector<8x1x4xf32>
    %15 = tpu.reciprocal %14 {approx = true} : vector<8x1x4xf32> -> vector<8x1x4xf32>
    %16 = vector.broadcast %15 : vector<8x1x4xf32> to vector<8x8x4xf32>
    %17 = arith.mulf %12, %16 : vector<8x8x4xf32>
    %cst_9 = arith.constant dense<0.000000e+00> : vector<8x8xf32>
    %18 = vector.multi_reduction <add>, %17, %cst_9 [2] : vector<8x8x4xf32> to vector<8x8xf32>
    %19 = vector.shape_cast %18 : vector<8x8xf32> to vector<8x8x1xf32>
    %cst_10 = arith.constant 4.000000e+00 : f32
    %20 = vector.broadcast %cst_10 : f32 to vector<8x8x1xf32>
    %21 = arith.divf %19, %20 : vector<8x8x1xf32>
    %22 = vector.broadcast %21 : vector<8x8x1xf32> to vector<8x8x32xf32>
    %23 = arith.mulf %22, %0 : vector<8x8x32xf32>
    %cst_11 = arith.constant dense<0.000000e+00> : vector<8x32xf32>
    %24 = vector.multi_reduction <add>, %23, %cst_11 [1] : vector<8x8x32xf32> to vector<8x32xf32>
    %c0_12 = arith.constant 0 : index
    %c0_13 = arith.constant 0 : index
    %25 = vector.load %arg4[%c0_12, %c0_13] : memref<8x32xf32, #tpu.memory_space<vmem>>, vector<8x32xf32>
    tpu.vector_store %arg4[%c0_12, %c0_13], %24 {strides = array<i32>} : memref<8x32xf32, #tpu.memory_space<vmem>>, vector<8x32xf32>,
    return
  }
  func.func @transform_0(%arg0: i32) -> (i32, i32, i32) {
    %c0_i32 = arith.constant 0 : i32
    %c0_i32_0 = arith.constant 0 : i32
    %c0_i32_1 = arith.constant 0 : i32
    return %arg0, %c0_i32, %c0_i32_0 : i32, i32, i32
  }
  func.func @transform_1(%arg0: i32) -> (i32, i32) {
    %c0_i32 = arith.constant 0 : i32
    %c0_i32_0 = arith.constant 0 : i32
    %c0_i32_1 = arith.constant 0 : i32
    return %c0_i32, %c0_i32_0 : i32, i32
  }
  func.func @transform_2(%arg0: i32) -> (i32, i32) {
    %c0_i32 = arith.constant 0 : i32
    %c0_i32_0 = arith.constant 0 : i32
    %c0_i32_1 = arith.constant 0 : i32
    return %c0_i32, %c0_i32_0 : i32, i32
  }
  func.func @transform_3(%arg0: i32) -> (i32, i32) {
    %c0_i32 = arith.constant 0 : i32
    %c0_i32_0 = arith.constant 0 : i32
    return %arg0, %c0_i32 : i32, i32
  }
}

</mosaic_0001>

<llo_original>
// kernel: tpu_custom_call.1
$region0: #{tpu_custom_call.1}
  #allocation0 [shape = 'u32[]', space=smem, size = 0x4, offset = 0x4, fixed_abs, tag = 'smem constant byte address 0x4 - core index']
  #allocation1 [shape = 'u32[72,128]{1,0:T(1,128)}', space=vmem, size = 0x9000, scoped, tag = 'internal scratch']
  %s0 = inlined_call_operand.hbm [shape: f32[16,8,32], index: 0, kind: input, shape index: {}]
  %s1 = inlined_call_operand.vmem [shape: f32[32,16], index: 1, kind: input, shape index: {}]
  %s2 = inlined_call_operand.vmem [shape: f32[16,4], index: 2, kind: input, shape index: {}]
  %s3 = inlined_call_operand.hbm [shape: f32[16,32], index: 3, kind: output, shape index: {}]
  %s4 = sld [smem:[#allocation0]]
  $region49: #{tpu_custom_call.1} parent=0
    _
  %s6 = ssub.s32 1, %s4
  %s7 = scalar_select 0, %s6, %s4
  $region1: #{tpu_custom_call.1} parent=0
    #allocation2 [shape = 'u8[65536]{0}', space=vmem, size = 0x10000, scoped, tag = 'input window, operand 0']
    #allocation3 [shape = 's32[2]{0}', space=sflag, size = 0x8, scoped, tag = 'scoped memory for tpu_custom_call.1']
    #allocation4 [shape = 's32[2]{0}', space=sflag, size = 0x8, scoped, tag = 'scoped memory for tpu_custom_call.1']
    #allocation5 [shape = 'u8[8192]{0}', space=vmem, size = 0x2000, scoped, tag = 'output window, operand 0']
    %8 = vsyncpa [#allocation3], 0
    %s9 = scalar_lea.sflag [#allocation3], 1
    %10 = vsyncpa %s9, 0
    %11 = vsyncpa [#allocation4], 0
    %s12 = scalar_lea.sflag [#allocation4], 1
    %13 = vsyncpa %s12, 0
    loop: start=0, step=1, limit=4
    $region2: #{tpu_custom_call.1} parent=1 // loop_pre_header
      _
    $region3: #{tpu_custom_call.1} parent=1 // loop_header
      %s15 = sphi 0, %s19
      %p16 = scmp.ge.s32.totalorder %s15, 4
      %s25 = sphi 0, %s27
      %s28 = sphi 0, %s25
      %s29 = sphi 0, %s28
      %s45 = sphi 0, %s29
      %s49 = sphi 0, %s49
      %s51 = sphi 0, %s49
      %s52 = sphi 0, %s51
      %s66 = sphi 0, %s52
      %s70 = sphi 0, %s70
      %s72 = sphi 0, %s70
      %s73 = sphi 0, %s72
      %s87 = sphi 0, %s73
      %s93 = sphi 0, %s95
      %s96 = sphi 0, %s93
      %s97 = sphi 0, %s96
      %s113 = sphi 0, %s97
    $region4: #{tpu_custom_call.1} parent=1 // loop_header_branch
      %18 = sbr.rel (%p16) target = $region8
    $region5: #{tpu_custom_call.1} parent=1 // loop_body
      %s20 = ssub.s32 %s15, 1
      %s21 = ssub.s32 %s15, 2
      %s22 = sadd.s32 %s15, 1
      %s23 = ssub.s32 %s15, %s22
      %p24 = scmp.eq.s32.totalorder %s23, 0
      %s26 = sadd.s32 %s25, 1
      %s27 = scalar_select %p24, %s25, %s26
      %p30 = pneg %p24
      %p31 = scmp.eq.s32.totalorder %s15, 1
      %p32 = por %p30, %p31
      %p33 = scmp.ne.s32.totalorder %s25, %s28
      %p34 = scmp.eq.s32.totalorder %s15, 0
      %p35 = por %p33, %p34
      %p36 = scmp.ne.s32.totalorder %s25, %s28
      %p37 = scmp.eq.s32.totalorder %s20, 1
      %p38 = por %p36, %p37
      %p39 = scmp.ne.s32.totalorder %s28, %s29
      %p40 = scmp.eq.s32.totalorder %s20, 0
      %p41 = por %p39, %p40
      %p42 = scmp.ne.s32.totalorder %s28, %s29
      %p43 = scmp.eq.s32.totalorder %s21, 1
      %p44 = por %p42, %p43
      %p46 = scmp.ne.s32.totalorder %s29, %s45
      %p47 = scmp.eq.s32.totalorder %s21, 0
      %p48 = por %p46, %p47
      %s50 = sadd.s32 %s49, 1
      %p53 = scmp.eq.s32.totalorder %s15, 1
      %p54 = scmp.ne.s32.totalorder %s49, %s51
      %p55 = scmp.eq.s32.totalorder %s15, 0
      %p56 = por %p54, %p55
      %p57 = scmp.ne.s32.totalorder %s49, %s51
      %p58 = scmp.eq.s32.totalorder %s20, 1
      %p59 = por %p57, %p58
      %p60 = scmp.ne.s32.totalorder %s51, %s52
      %p61 = scmp.eq.s32.totalorder %s20, 0
      %p62 = por %p60, %p61
      %p63 = scmp.ne.s32.totalorder %s51, %s52
      %p64 = scmp.eq.s32.totalorder %s21, 1
      %p65 = por %p63, %p64
      %p67 = scmp.ne.s32.totalorder %s52, %s66
      %p68 = scmp.eq.s32.totalorder %s21, 0
      %p69 = por %p67, %p68
      %s71 = sadd.s32 %s70, 1
      %p74 = scmp.eq.s32.totalorder %s15, 1
      %p75 = scmp.ne.s32.totalorder %s70, %s72
      %p76 = scmp.eq.s32.totalorder %s15, 0
      %p77 = por %p75, %p76
      %p78 = scmp.ne.s32.totalorder %s70, %s72
      %p79 = scmp.eq.s32.totalorder %s20, 1
      %p80 = por %p78, %p79
      %p81 = scmp.ne.s32.totalorder %s72, %s73
      %p82 = scmp.eq.s32.totalorder %s20, 0
      %p83 = por %p81, %p82
      %p84 = scmp.ne.s32.totalorder %s72, %s73
      %p85 = scmp.eq.s32.totalorder %s21, 1
      %p86 = por %p84, %p85
      %p88 = scmp.ne.s32.totalorder %s73, %s87
      %p89 = scmp.eq.s32.totalorder %s21, 0
      %p90 = por %p88, %p89
      %s91 = ssub.s32 %s15, %s22
      %p92 = scmp.eq.s32.totalorder %s91, 0
      %s94 = sadd.s32 %s93, 1
      %s95 = scalar_select %p92, %s93, %s94
      %p98 = pneg %p92
      %p99 = scmp.eq.s32.totalorder %s15, 1
      %p100 = por %p98, %p99
      %p101 = scmp.ne.s32.totalorder %s93, %s96
      %p102 = scmp.eq.s32.totalorder %s15, 0
      %p103 = por %p101, %p102
      %p104 = scmp.ne.s32.totalorder %s93, %s96
      %p105 = scmp.eq.s32.totalorder %s20, 1
      %p106 = por %p104, %p105
      %p107 = scmp.ne.s32.totalorder %s96, %s97
      %p108 = scmp.eq.s32.totalorder %s20, 0
      %p109 = por %p107, %p108
      %p110 = scmp.ne.s32.totalorder %s96, %s97
      %p111 = scmp.eq.s32.totalorder %s21, 1
      %p112 = por %p110, %p111
      %p114 = scmp.ne.s32.totalorder %s97, %s113
      %p115 = scmp.eq.s32.totalorder %s21, 0
      %p116 = por %p114, %p115
      %p117 = scmp.le.s32.totalorder 1, %s15
      %p118 = scmp.lt.s32.totalorder %s15, 3
      %p119 = pnand %p117, %p118
      %p120 = pneg %p119
      // Predicated region
      $region9: #{tpu_custom_call.1} parent=5 // pred_check
        _
      $region10: #{tpu_custom_call.1} parent=5 // pred_check_branch
        %122 = sbr.rel (%p119) target = $region12
      $region11: #{tpu_custom_call.1} parent=5 // pred_region
        %s123 = ssub.s32 %s15, 1
        // Predicated region
        $region13: #{tpu_custom_call.1} parent=11 // pred_check
          %p124 = pneg %p62
        $region14: #{tpu_custom_call.1} parent=11 // pred_check_branch
          %126 = sbr.rel (%p124) target = $region16
        $region15: #{tpu_custom_call.1} parent=11 // pred_region
          _
        $region16: #{tpu_custom_call.1} parent=11 // pred_fallthru
          _
        // Predicated region
        $region17: #{tpu_custom_call.1} parent=11 // pred_check
          %p127 = pneg %p83
        $region18: #{tpu_custom_call.1} parent=11 // pred_check_branch
          %129 = sbr.rel (%p127) target = $region20
        $region19: #{tpu_custom_call.1} parent=11 // pred_region
          _
        $region20: #{tpu_custom_call.1} parent=11 // pred_fallthru
          _
      $region12: #{tpu_custom_call.1} parent=5 // pred_fallthru
        _
      %p130 = scmp.lt.s32.totalorder %s15, 2
      // Predicated region
      $region21: #{tpu_custom_call.1} parent=5 // pred_check
        %p131 = pneg %p130
      $region22: #{tpu_custom_call.1} parent=5 // pred_check_branch
        %133 = sbr.rel (%p131) target = $region24
      $region23: #{tpu_custom_call.1} parent=5 // pred_region
        // Predicated region
        $region25: #{tpu_custom_call.1} parent=23 // pred_check
          %p134 = pneg %p35
        $region26: #{tpu_custom_call.1} parent=23 // pred_check_branch
          %136 = sbr.rel (%p134) target = $region28
        $region27: #{tpu_custom_call.1} parent=23 // pred_region
          %s137 = sand.u32 %s25, 1
          %s138 = scalar_lea.sflag [#allocation3], %s137
          %s139 = sand.u32 %s25, 1
          %s140 = smul.addr %s139, 64
          %s141 = scalar_lea.vmem [#allocation2], %s140
          %s142 = smul.u32 8, %s15
          %144 = vsyncadd %s138, 0
          %s145 = smul.addr %s142, 8
          %s146 = scalar_lea.hbm %s0, %s145
          %s147 = sshll.u32 %s146, 4
          %s148 = int_to_ptr.hbm [resolvable:$true] %s147
          %s149 = sshll.u32 %s141, 4
          %s150 = int_to_ptr.vmem [resolvable:$true] %s149
          %155 = dma.hbm_to_vmem [thread:$0]  %s148, 1024, %s150, %s138, 128, 128, 8
        $region28: #{tpu_custom_call.1} parent=23 // pred_fallthru
          _
      $region24: #{tpu_custom_call.1} parent=5 // pred_fallthru
        _
      %p156 = scmp.le.s32.totalorder 1, %s15
      %p157 = scmp.lt.s32.totalorder %s15, 3
      %p158 = pnand %p156, %p157
      %p159 = pneg %p158
      // Predicated region
      $region29: #{tpu_custom_call.1} parent=5 // pred_check
        _
      $region30: #{tpu_custom_call.1} parent=5 // pred_check_branch
        %161 = sbr.rel (%p158) target = $region32
      $region31: #{tpu_custom_call.1} parent=5 // pred_region
        %s162 = ssub.s32 %s15, 1
        %s163 = sand.u32 %s28, 1
        %s164 = scalar_lea.sflag [#allocation3], %s163
        %s165 = sand.u32 %s28, 1
        %s166 = smul.addr %s165, 64
        %s167 = scalar_lea.vmem [#allocation2], %s166
        // Predicated region
        $region33: #{tpu_custom_call.1} parent=31 // pred_check
          %p168 = pneg %p41
        $region34: #{tpu_custom_call.1} parent=31 // pred_check_branch
          %170 = sbr.rel (%p168) target = $region36
        $region35: #{tpu_custom_call.1} parent=31 // pred_region
          %172 = dma.done %s164, 1024
        $region36: #{tpu_custom_call.1} parent=31 // pred_fallthru
          _
        %s173 = sand.u32 %s28, 1
        %s174 = scalar_lea.sflag [#allocation3], %s173
        %s175 = sand.u32 %s28, 1
        %s176 = smul.addr %s175, 64
        %s177 = scalar_lea.vmem [#allocation2], %s176
        %p178 = pneg %p41
        %p179 = pneg %p38
        %p180 = pneg %p62
        %p181 = pneg %p59
        %p182 = pneg %p83
        %p183 = pneg %p80
        %p184 = pneg %p109
        %p185 = pneg %p106
        %s186 = sand.u32 %s96, 1
        %s187 = scalar_lea.sflag [#allocation4], %s186
        %s188 = sand.u32 %s96, 1
        %s189 = smul.addr %s188, 8
        %s190 = scalar_lea.vmem [#allocation5], %s189
        %s191 = smul.u32 8, %s20
        %v192 = vld [vmem:[%s167] sm:$0xff]
        %v193 = vld [vmem:[%s167 + $0x8] sm:$0xff]
        %v194 = vld [vmem:[%s167 + $0x10] sm:$0xff]
        %v195 = vld [vmem:[%s167 + $0x18] sm:$0xff]
        %v196 = vld [vmem:[%s167 + $0x20] sm:$0xff]
        %v197 = vld [vmem:[%s167 + $0x28] sm:$0xff]
        %v198 = vld [vmem:[%s167 + $0x30] sm:$0xff]
        %v199 = vld [vmem:[%s167 + $0x38] sm:$0xff]
        %v200 = vld [vmem:[%s1] sm:$0xff]
        %v201 = vld [vmem:[%s1 + $0x8] sm:$0xff]
        %v202 = vld [vmem:[%s1 + $0x10] sm:$0xff]
        %v203 = vld [vmem:[%s1 + $0x18] sm:$0xff]
        %v204 = vld [vmem:[%s2] sm:$0xff]
        %v205 = vld [vmem:[%s2 + $0x8] sm:$0xff]
        %vm206 = vcmask 261120
        %v208 = vsel %vm206, %v192, 0
        %v211 = vsel %vm206, %v193, 0
        %v214 = vsel %vm206, %v194, 0
        %v217 = vsel %vm206, %v195, 0
        %v220 = vsel %vm206, %v196, 0
        %v223 = vsel %vm206, %v197, 0
        %v226 = vsel %vm206, %v198, 0
        %v229 = vsel %vm206, %v199, 0
        %231 = vmatpush.msra.mxu0 0.0
        %232 = vmatpush.msra.mxu0 0.0
        %233 = vmatpush.msra.mxu0 0.0
        %234 = vmatpush.msra.mxu0 0.0
        %235 = vmatpush.msra.mxu0 0.0
        %236 = vmatpush.msra.mxu0 0.0
        %237 = vmatpush.msra.mxu0 0.0
        %238 = vmatpush.msra.mxu0 0.0
        %239 = vmatpush.msra.mxu0 0.0
        %240 = vmatpush.msra.mxu0 0.0
        %241 = vmatpush.msra.mxu0 0.0
        %242 = vmatpush.msra.mxu0 0.0
        %243 = vmatpush.msra.mxu0 %v203
        %244 = vmatpush.msra.mxu0 %v202
        %245 = vmatpush.msra.mxu0 %v201
        %246 = vmatpush.msra.mxu0 %v200
        %247 = vmatmul.f32.gmra.mxu0 %v208
        %v248 = vpop.f32.mrf.mxu0
        %v249 = vadd.f32 0.0, %v248
        %250 = vmatmul.f32.gmra.mxu0 %v211
        %v251 = vpop.f32.mrf.mxu0
        %v252 = vadd.f32 0.0, %v251
        %253 = vmatmul.f32.gmra.mxu0 %v214
        %v254 = vpop.f32.mrf.mxu0
        %v255 = vadd.f32 0.0, %v254
        %256 = vmatmul.f32.gmra.mxu0 %v217
        %v257 = vpop.f32.mrf.mxu0
        %v258 = vadd.f32 0.0, %v257
        %259 = vmatmul.f32.gmra.mxu0 %v220
        %v260 = vpop.f32.mrf.mxu0
        %v261 = vadd.f32 0.0, %v260
        %262 = vmatmul.f32.gmra.mxu0 %v223
        %v263 = vpop.f32.mrf.mxu0
        %v264 = vadd.f32 0.0, %v263
        %265 = vmatmul.f32.gmra.mxu0 %v226
        %v266 = vpop.f32.mrf.mxu0
        %v267 = vadd.f32 0.0, %v266
        %268 = vmatmul.f32.gmra.mxu0 %v229
        %v269 = vpop.f32.mrf.mxu0
        %v270 = vadd.f32 0.0, %v269
        %271 = vdwg.mxu0
        %v272 = vtanh.pop %v249
        %v273 = vtanh.pop %v252
        %v274 = vtanh.pop %v255
        %v275 = vtanh.pop %v258
        %v276 = vtanh.pop %v261
        %v277 = vtanh.pop %v264
        %v278 = vtanh.pop %v267
        %v279 = vtanh.pop %v270
        %vm280 = vcmask 130048
        %v282 = vsel %vm280, %v272, 0
        %v285 = vsel %vm280, %v273, 0
        %v288 = vsel %vm280, %v274, 0
        %v291 = vsel %vm280, %v275, 0
        %v294 = vsel %vm280, %v276, 0
        %v297 = vsel %vm280, %v277, 0
        %v300 = vsel %vm280, %v278, 0
        %v303 = vsel %vm280, %v279, 0
        %305 = vmatpush.msra.mxu0 0.0
        %306 = vmatpush.msra.mxu0 0.0
        %307 = vmatpush.msra.mxu0 0.0
        %308 = vmatpush.msra.mxu0 0.0
        %309 = vmatpush.msra.mxu0 0.0
        %310 = vmatpush.msra.mxu0 0.0
        %311 = vmatpush.msra.mxu0 0.0
        %312 = vmatpush.msra.mxu0 0.0
        %313 = vmatpush.msra.mxu0 0.0
        %314 = vmatpush.msra.mxu0 0.0
        %315 = vmatpush.msra.mxu0 0.0
        %316 = vmatpush.msra.mxu0 0.0
        %317 = vmatpush.msra.mxu0 0.0
        %318 = vmatpush.msra.mxu0 0.0
        %319 = vmatpush.msra.mxu0 %v205
        %320 = vmatpush.msra.mxu0 %v204
        %321 = vmatmul.f32.gmra.mxu0 %v282
        %v322 = vpop.f32.mrf.mxu0
        %v323 = vadd.f32 0.0, %v322
        %324 = vmatmul.f32.gmra.mxu0 %v285
        %v325 = vpop.f32.mrf.mxu0
        %v326 = vadd.f32 0.0, %v325
        %327 = vmatmul.f32.gmra.mxu0 %v288
        %v328 = vpop.f32.mrf.mxu0
        %v329 = vadd.f32 0.0, %v328
        %330 = vmatmul.f32.gmra.mxu0 %v291
        %v331 = vpop.f32.mrf.mxu0
        %v332 = vadd.f32 0.0, %v331
        %333 = vmatmul.f32.gmra.mxu0 %v294
        %v334 = vpop.f32.mrf.mxu0
        %v335 = vadd.f32 0.0, %v334
        %336 = vmatmul.f32.gmra.mxu0 %v297
        %v337 = vpop.f32.mrf.mxu0
        %v338 = vadd.f32 0.0, %v337
        %339 = vmatmul.f32.gmra.mxu0 %v300
        %v340 = vpop.f32.mrf.mxu0
        %v341 = vadd.f32 0.0, %v340
        %342 = vmatmul.f32.gmra.mxu0 %v303
        %v343 = vpop.f32.mrf.mxu0
        %v344 = vadd.f32 0.0, %v343
        %345 = vdwg.mxu0
        %vm346 = vcmask 31744
        %v347 = vsel %vm346, %v323, -inf
        %v348 = vrot.slane %v347, 4
        %v349 = vmax.f32 %v347, %v348
        %v350 = vrot.slane %v349, 2
        %v351 = vmax.f32 %v349, %v350
        %v352 = vrot.slane %v351, 1
        %v353 = vmax.f32 %v351, %v352
        %v354 = vsel %vm346, %v326, -inf
        %v355 = vrot.slane %v354, 4
        %v356 = vmax.f32 %v354, %v355
        %v357 = vrot.slane %v356, 2
        %v358 = vmax.f32 %v356, %v357
        %v359 = vrot.slane %v358, 1
        %v360 = vmax.f32 %v358, %v359
        %v361 = vsel %vm346, %v329, -inf
        %v362 = vrot.slane %v361, 4
        %v363 = vmax.f32 %v361, %v362
        %v364 = vrot.slane %v363, 2
        %v365 = vmax.f32 %v363, %v364
        %v366 = vrot.slane %v365, 1
        %v367 = vmax.f32 %v365, %v366
        %v368 = vsel %vm346, %v332, -inf
        %v369 = vrot.slane %v368, 4
        %v370 = vmax.f32 %v368, %v369
        %v371 = vrot.slane %v370, 2
        %v372 = vmax.f32 %v370, %v371
        %v373 = vrot.slane %v372, 1
        %v374 = vmax.f32 %v372, %v373
        %v375 = vsel %vm346, %v335, -inf
        %v376 = vrot.slane %v375, 4
        %v377 = vmax.f32 %v375, %v376
        %v378 = vrot.slane %v377, 2
        %v379 = vmax.f32 %v377, %v378
        %v380 = vrot.slane %v379, 1
        %v381 = vmax.f32 %v379, %v380
        %v382 = vsel %vm346, %v338, -inf
        %v383 = vrot.slane %v382, 4
        %v384 = vmax.f32 %v382, %v383
        %v385 = vrot.slane %v384, 2
        %v386 = vmax.f32 %v384, %v385
        %v387 = vrot.slane %v386, 1
        %v388 = vmax.f32 %v386, %v387
        %v389 = vsel %vm346, %v341, -inf
        %v390 = vrot.slane %v389, 4
        %v391 = vmax.f32 %v389, %v390
        %v392 = vrot.slane %v391, 2
        %v393 = vmax.f32 %v391, %v392
        %v394 = vrot.slane %v393, 1
        %v395 = vmax.f32 %v393, %v394
        %v396 = vsel %vm346, %v344, -inf
        %v397 = vrot.slane %v396, 4
        %v398 = vmax.f32 %v396, %v397
        %v399 = vrot.slane %v398, 2
        %v400 = vmax.f32 %v398, %v399
        %v401 = vrot.slane %v400, 1
        %v402 = vmax.f32 %v400, %v401
        %v403 = vsub.f32 %v323, %v353
        %v404 = vsub.f32 %v326, %v360
        %v405 = vsub.f32 %v329, %v367
        %v406 = vsub.f32 %v332, %v374
        %v407 = vsub.f32 %v335, %v381
        %v408 = vsub.f32 %v338, %v388
        %v409 = vsub.f32 %v341, %v395
        %v410 = vsub.f32 %v344, %v402
        %v411 = vmul.f32 %v403, 1.442695
        %v412 = vpow.pop %v411
        %v413 = vmul.f32 %v404, 1.442695
        %v414 = vpow.pop %v413
        %v415 = vmul.f32 %v405, 1.442695
        %v416 = vpow.pop %v415
        %v417 = vmul.f32 %v406, 1.442695
        %v418 = vpow.pop %v417
        %v419 = vmul.f32 %v407, 1.442695
        %v420 = vpow.pop %v419
        %v421 = vmul.f32 %v408, 1.442695
        %v422 = vpow.pop %v421
        %v423 = vmul.f32 %v409, 1.442695
        %v424 = vpow.pop %v423
        %v425 = vmul.f32 %v410, 1.442695
        %v426 = vpow.pop %v425
        %v427 = vsel %vm346, %v412, 0.0
        %v428 = vrot.slane %v427, 4
        %v429 = vadd.f32 %v427, %v428
        %v430 = vrot.slane %v429, 2
        %v431 = vadd.f32 %v429, %v430
        %v432 = vrot.slane %v431, 1
        %v433 = vadd.f32 %v431, %v432
        %v434 = vsel %vm346, %v414, 0.0
        %v435 = vrot.slane %v434, 4
        %v436 = vadd.f32 %v434, %v435
        %v437 = vrot.slane %v436, 2
        %v438 = vadd.f32 %v436, %v437
        %v439 = vrot.slane %v438, 1
        %v440 = vadd.f32 %v438, %v439
        %v441 = vsel %vm346, %v416, 0.0
        %v442 = vrot.slane %v441, 4
        %v443 = vadd.f32 %v441, %v442
        %v444 = vrot.slane %v443, 2
        %v445 = vadd.f32 %v443, %v444
        %v446 = vrot.slane %v445, 1
        %v447 = vadd.f32 %v445, %v446
        %v448 = vsel %vm346, %v418, 0.0
        %v449 = vrot.slane %v448, 4
        %v450 = vadd.f32 %v448, %v449
        %v451 = vrot.slane %v450, 2
        %v452 = vadd.f32 %v450, %v451
        %v453 = vrot.slane %v452, 1
        %v454 = vadd.f32 %v452, %v453
        %v455 = vsel %vm346, %v420, 0.0
        %v456 = vrot.slane %v455, 4
        %v457 = vadd.f32 %v455, %v456
        %v458 = vrot.slane %v457, 2
        %v459 = vadd.f32 %v457, %v458
        %v460 = vrot.slane %v459, 1
        %v461 = vadd.f32 %v459, %v460
        %v462 = vsel %vm346, %v422, 0.0
        %v463 = vrot.slane %v462, 4
        %v464 = vadd.f32 %v462, %v463
        %v465 = vrot.slane %v464, 2
        %v466 = vadd.f32 %v464, %v465
        %v467 = vrot.slane %v466, 1
        %v468 = vadd.f32 %v466, %v467
        %v469 = vsel %vm346, %v424, 0.0
        %v470 = vrot.slane %v469, 4
        %v471 = vadd.f32 %v469, %v470
        %v472 = vrot.slane %v471, 2
        %v473 = vadd.f32 %v471, %v472
        %v474 = vrot.slane %v473, 1
        %v475 = vadd.f32 %v473, %v474
        %v476 = vsel %vm346, %v426, 0.0
        %v477 = vrot.slane %v476, 4
        %v478 = vadd.f32 %v476, %v477
        %v479 = vrot.slane %v478, 2
        %v480 = vadd.f32 %v478, %v479
        %v481 = vrot.slane %v480, 1
        %v482 = vadd.f32 %v480, %v481
        %v483 = vrcp.pop %v433
        %v484 = vrcp.pop %v440
        %v485 = vrcp.pop %v447
        %v486 = vrcp.pop %v454
        %v487 = vrcp.pop %v461
        %v488 = vrcp.pop %v468
        %v489 = vrcp.pop %v475
        %v490 = vrcp.pop %v482
        %v491 = vmul.f32 %v412, %v483
        %v492 = vmul.f32 %v414, %v484
        %v493 = vmul.f32 %v416, %v485
        %v494 = vmul.f32 %v418, %v486
        %v495 = vmul.f32 %v420, %v487
        %v496 = vmul.f32 %v422, %v488
        %v497 = vmul.f32 %v424, %v489
        %v498 = vmul.f32 %v426, %v490
        %v499 = vsel %vm346, %v491, 0.0
        %500 = vadd.xlane.f32.xlu0 %v499
        %v501 = vpop.xlane.xlu0 %500
        %v502 = vsel %vm346, %v492, 0.0
        %503 = vadd.xlane.f32.xlu0 %v502
        %v504 = vpop.xlane.xlu0 %503
        %v505 = vsel %vm346, %v493, 0.0
        %506 = vadd.xlane.f32.xlu0 %v505
        %v507 = vpop.xlane.xlu0 %506
        %v508 = vsel %vm346, %v494, 0.0
        %509 = vadd.xlane.f32.xlu0 %v508
        %v510 = vpop.xlane.xlu0 %509
        %v511 = vsel %vm346, %v495, 0.0
        %512 = vadd.xlane.f32.xlu0 %v511
        %v513 = vpop.xlane.xlu0 %512
        %v514 = vsel %vm346, %v496, 0.0
        %515 = vadd.xlane.f32.xlu0 %v514
        %v516 = vpop.xlane.xlu0 %515
        %v517 = vsel %vm346, %v497, 0.0
        %518 = vadd.xlane.f32.xlu0 %v517
        %v519 = vpop.xlane.xlu0 %518
        %v520 = vsel %vm346, %v498, 0.0
        %521 = vadd.xlane.f32.xlu0 %v520
        %v522 = vpop.xlane.xlu0 %521
        %v523 = vrcp.pop 4.0
        %v524 = vmul.f32 4.0, %v523
        %v525 = vsub.f32 1.0, %v524
        %v526 = vmul.f32 %v523, %v525
        %v527 = vadd.f32 %v523, %v526
        %vm528 = vweird.f32 %v523
        %v529 = vsel %vm528, %v523, %v527
        %v530 = vmul.f32 %v501, %v529
        %v531 = vmul.f32 %v504, %v529
        %v532 = vmul.f32 %v507, %v529
        %v533 = vmul.f32 %v510, %v529
        %v534 = vmul.f32 %v513, %v529
        %v535 = vmul.f32 %v516, %v529
        %v536 = vmul.f32 %v519, %v529
        %v537 = vmul.f32 %v522, %v529
        %v538 = vmul.f32 %v530, %v192
        %v539 = vmul.f32 %v531, %v193
        %v540 = vmul.f32 %v532, %v194
        %v541 = vmul.f32 %v533, %v195
        %v542 = vmul.f32 %v534, %v196
        %v543 = vmul.f32 %v535, %v197
        %v544 = vmul.f32 %v536, %v198
        %v545 = vmul.f32 %v537, %v199
        %v546 = vsel %vm206, %v538, 0.0
        %v547 = vrot.slane %v546, 4
        %v548 = vadd.f32 %v546, %v547
        %v549 = vrot.slane %v548, 2
        %v550 = vadd.f32 %v548, %v549
        %v551 = vrot.slane %v550, 1
        %v552 = vadd.f32 %v550, %v551
        %v553 = vsel %vm206, %v539, 0.0
        %v554 = vrot.slane %v553, 4
        %v555 = vadd.f32 %v553, %v554
        %v556 = vrot.slane %v555, 2
        %v557 = vadd.f32 %v555, %v556
        %v558 = vrot.slane %v557, 1
        %v559 = vadd.f32 %v557, %v558
        %v560 = vsel %vm206, %v540, 0.0
        %v561 = vrot.slane %v560, 4
        %v562 = vadd.f32 %v560, %v561
        %v563 = vrot.slane %v562, 2
        %v564 = vadd.f32 %v562, %v563
        %v565 = vrot.slane %v564, 1
        %v566 = vadd.f32 %v564, %v565
        %v567 = vsel %vm206, %v541, 0.0
        %v568 = vrot.slane %v567, 4
        %v569 = vadd.f32 %v567, %v568
        %v570 = vrot.slane %v569, 2
        %v571 = vadd.f32 %v569, %v570
        %v572 = vrot.slane %v571, 1
        %v573 = vadd.f32 %v571, %v572
        %v574 = vsel %vm206, %v542, 0.0
        %v575 = vrot.slane %v574, 4
        %v576 = vadd.f32 %v574, %v575
        %v577 = vrot.slane %v576, 2
        %v578 = vadd.f32 %v576, %v577
        %v579 = vrot.slane %v578, 1
        %v580 = vadd.f32 %v578, %v579
        %v581 = vsel %vm206, %v543, 0.0
        %v582 = vrot.slane %v581, 4
        %v583 = vadd.f32 %v581, %v582
        %v584 = vrot.slane %v583, 2
        %v585 = vadd.f32 %v583, %v584
        %v586 = vrot.slane %v585, 1
        %v587 = vadd.f32 %v585, %v586
        %v588 = vsel %vm206, %v544, 0.0
        %v589 = vrot.slane %v588, 4
        %v590 = vadd.f32 %v588, %v589
        %v591 = vrot.slane %v590, 2
        %v592 = vadd.f32 %v590, %v591
        %v593 = vrot.slane %v592, 1
        %v594 = vadd.f32 %v592, %v593
        %v595 = vsel %vm206, %v545, 0.0
        %v596 = vrot.slane %v595, 4
        %v597 = vadd.f32 %v595, %v596
        %v598 = vrot.slane %v597, 2
        %v599 = vadd.f32 %v597, %v598
        %v600 = vrot.slane %v599, 1
        %v601 = vadd.f32 %v599, %v600
        %vm610 = vcmask 1041409
        %v611 = vsel %vm610, %v559, %v552
        %vm612 = vcmask 1042434
        %v613 = vsel %vm612, %v566, %v611
        %vm614 = vcmask 1043459
        %v615 = vsel %vm614, %v573, %v613
        %vm616 = vcmask 1044484
        %v617 = vsel %vm616, %v580, %v615
        %vm618 = vcmask 1045509
        %v619 = vsel %vm618, %v587, %v617
        %vm620 = vcmask 1046534
        %v621 = vsel %vm620, %v594, %v619
        %vm622 = vcmask 1047559
        %v623 = vsel %vm622, %v601, %v621
        %625 = vst.msk [vmem:[%s190] sm:$0xff] %vm206, %v623
        %s626 = sand.u32 %s96, 1
        %s627 = scalar_lea.sflag [#allocation4], %s626
        %s628 = sand.u32 %s96, 1
        %s629 = smul.addr %s628, 8
        %s630 = scalar_lea.vmem [#allocation5], %s629
        // Predicated region
        $region37: #{tpu_custom_call.1} parent=31 // pred_check
          %p631 = pneg %p106
        $region38: #{tpu_custom_call.1} parent=31 // pred_check_branch
          %633 = sbr.rel (%p631) target = $region40
        $region39: #{tpu_custom_call.1} parent=31 // pred_region
          %635 = vsyncadd %s627, 0
          %s636 = smul.addr %s20, 8
          %s637 = scalar_lea.hbm %s3, %s636
          %s639 = sshll.u32 %s630, 4
          %s640 = int_to_ptr.vmem [resolvable:$true] %s639
          %s641 = sshll.u32 %s637, 4
          %s642 = int_to_ptr.hbm [resolvable:$true] %s641
          %644 = dma.vmem_to_hbm [thread:$0]  %s640, 128, %s642, %s627
        $region40: #{tpu_custom_call.1} parent=31 // pred_fallthru
          _
      $region32: #{tpu_custom_call.1} parent=5 // pred_fallthru
        _
      %p645 = scmp.le.s32.totalorder 2, %s15
      // Predicated region
      $region41: #{tpu_custom_call.1} parent=5 // pred_check
        %p646 = pneg %p645
      $region42: #{tpu_custom_call.1} parent=5 // pred_check_branch
        %648 = sbr.rel (%p646) target = $region44
      $region43: #{tpu_custom_call.1} parent=5 // pred_region
        %s649 = ssub.s32 %s15, 2
        // Predicated region
        $region45: #{tpu_custom_call.1} parent=43 // pred_check
          %p650 = pneg %p112
        $region46: #{tpu_custom_call.1} parent=43 // pred_check_branch
          %652 = sbr.rel (%p650) target = $region48
        $region47: #{tpu_custom_call.1} parent=43 // pred_region
          %s653 = sand.u32 %s97, 1
          %s654 = scalar_lea.sflag [#allocation4], %s653
          %s655 = sand.u32 %s97, 1
          %s656 = smul.addr %s655, 8
          %s657 = scalar_lea.vmem [#allocation5], %s656
          %659 = dma.done %s654, 128
        $region48: #{tpu_custom_call.1} parent=43 // pred_fallthru
          _
      $region44: #{tpu_custom_call.1} parent=5 // pred_fallthru
        _
    $region6: #{tpu_custom_call.1} parent=1 // loop_footer
      %s19 = sadd.s32 1, %s15
    $region7: #{tpu_custom_call.1} parent=1 // loop_footer_branch
      %14 = sbr.rel target = $region3
    $region8: #{tpu_custom_call.1} parent=1 // loop_exit
      _
    %660 = vsyncpa [#allocation3], 1
    %s661 = scalar_lea.sflag [#allocation3], 1
    %662 = vsyncpa %s661, 1
    %663 = vsyncpa [#allocation4], 1
    %s664 = scalar_lea.sflag [#allocation4], 1
    %665 = vsyncpa %s664, 1

</llo_original>
